<compile_context>
chip_gen: v7x
topology: tpu7x:2x2x1
jax: 0.10.0
libtpu: 0.0.40
codegen_flags: <defaults>
</compile_context>

<pallas_src>
import jax
import jax.numpy as jnp
from jax.experimental import pallas as pl
from jax.experimental.pallas import tpu as pltpu


def _vmem_limit_bytes():
    """~75% of per-core VMEM: ~48 MiB on v7x (64 MiB), ~96 MiB on v5e/v6e (128 MiB)."""
    try:
        cap = int(pltpu.get_tpu_info().vmem_capacity_bytes)
    except Exception:
        cap = 64 * 1024 * 1024  # conservative fallback, safe on every generation
    return (cap * 3) // 4


_VMEM_LIMIT_BYTES = _vmem_limit_bytes()


def _pick_block(dim, preferred, granule, min_tiles=1):
    """Largest tile <= preferred that divides `dim` and is a multiple of `granule`.
    With min_tiles > 1, additionally caps the tile so the axis gets >= min_tiles tiles
    when possible (lets the 'parallel' axis shard across v7x's 2 TensorCores).
    Falls back to the full dim (always a legal block shape).
    # TODO(synk): for graphs whose N_dst/N_src are not (32,128)-aligned, pad the
    # adjacency / features outside the kernel instead of relying on this fallback."""
    if dim % granule != 0:
        return dim
    cap = min(preferred, dim)
    if min_tiles > 1 and dim >= granule * min_tiles:
        cap = min(cap, (dim // min_tiles) // granule * granule)
    t = max(cap, granule)
    while dim % t != 0:
        t -= granule
    return t


# ---------------------------------------------------------------------------
# Kernels
# ---------------------------------------------------------------------------

def _project_kernel(h_ref, w_ref, o_ref):
    """hp = h @ [W_self | W_neigh]  (bf16 inputs, f32 accumulate, bf16 lane-dense store)."""
    o_ref[...] = jnp.dot(h_ref[...], w_ref[...],
                         preferred_element_type=jnp.float32).astype(o_ref.dtype)


def _sage_agg_kernel(adj_ref, hpn_ref, hps_ref, invdeg_ref, b_ref, o_ref, acc_ref):
    """out = relu( inv_deg * (A01 @ hp_neigh) + hp_self + b ), tiled over (dst, src)."""
    k = pl.program_id(1)

    @pl.when(k == 0)
    def _init():
        acc_ref[...] = jnp.zeros_like(acc_ref)

    # binary int8 adjacency -> bf16 on-chip (values 0/1 exact); f32 MXU accumulation
    acc_ref[...] += jnp.dot(adj_ref[...].astype(jnp.bfloat16), hpn_ref[...],
                            preferred_element_type=jnp.float32)

    @pl.when(k == pl.num_programs(1) - 1)
    def _finalize():
        out = (acc_ref[...] * invdeg_ref[...]
               + hps_ref[...].astype(jnp.float32) + b_ref[...])
        o_ref[...] = jnp.maximum(out, 0.0).astype(o_ref.dtype)


def _sage_agg_prompt_kernel(adj_ref, hpn_ref, hps_ref, invdeg_ref, b_ref, g_ref,
                            w1_ref, w2_ref, bp_ref, o_ref, acc_ref):
    """Last layer fused with the prompt head:
       out = relu(inv_deg*(A01@hp_n) + hp_s + b) @ W1 + gfeat_dst @ W2 + bp
       (class axis zero-padded to 128 lanes)."""
    k = pl.program_id(1)

    @pl.when(k == 0)
    def _init():
        acc_ref[...] = jnp.zeros_like(acc_ref)

    acc_ref[...] += jnp.dot(adj_ref[...].astype(jnp.bfloat16), hpn_ref[...],
                            preferred_element_type=jnp.float32)

    @pl.when(k == pl.num_programs(1) - 1)
    def _finalize():
        h = jnp.maximum(acc_ref[...] * invdeg_ref[...]
                        + hps_ref[...].astype(jnp.float32) + b_ref[...], 0.0)
        out = (jnp.dot(h.astype(jnp.bfloat16), w1_ref[...],
                       preferred_element_type=jnp.float32)
               + jnp.dot(g_ref[...], w2_ref[...],
                         preferred_element_type=jnp.float32)
               + bp_ref[...])
        o_ref[...] = out.astype(o_ref.dtype)


# ---------------------------------------------------------------------------
# pallas_call wrappers
# ---------------------------------------------------------------------------

def project(h_bf16, w_cat_bf16):
    """hp = h @ [W_self | W_neigh]  ->  (N_src, 2*F_out) bf16."""
    n_src, f_in = h_bf16.shape
    f2 = w_cat_bf16.shape[1]
    tr = _pick_block(n_src, 256, 16, min_tiles=2)
    return pl.pallas_call(
        _project_kernel,
        out_shape=jax.ShapeDtypeStruct((n_src, f2), jnp.bfloat16),
        grid_spec=pltpu.PrefetchScalarGridSpec(
            num_scalar_prefetch=0,
            grid=(n_src // tr,),
            in_specs=[pl.BlockSpec((tr, f_in), lambda i: (i, 0)),
                      pl.BlockSpec((f_in, f2), lambda i: (0, 0))],
            out_specs=pl.BlockSpec((tr, f2), lambda i: (i, 0))),
        compiler_params=pltpu.CompilerParams(
            dimension_semantics=("parallel",),
            vmem_limit_bytes=_VMEM_LIMIT_BYTES),
    )(h_bf16, w_cat_bf16)


def sage_aggregate(adj_i8, inv_deg, hp, bias):
    """relu( inv_deg * (A01 @ hp[:, F:2F]) + hp[:N_dst, :F] + b )  ->  (N_dst, F) bf16."""
    n_dst, n_src = adj_i8.shape
    f_out = hp.shape[1] // 2
    tm = _pick_block(n_dst, 512, 32, min_tiles=2)
    tk = _pick_block(n_src, 2048, 128)
    return pl.pallas_call(
        _sage_agg_kernel,
        out_shape=jax.ShapeDtypeStruct((n_dst, f_out), jnp.bfloat16),
        grid_spec=pltpu.PrefetchScalarGridSpec(
            num_scalar_prefetch=0,
            grid=(n_dst // tm, n_src // tk),
            in_specs=[
                pl.BlockSpec((tm, tk), lambda i, k: (i, k),
                             pipeline_mode=pl.Buffered(3)),      # A tile (int8, 0/1)
                pl.BlockSpec((tk, f_out), lambda i, k: (k, 1)),  # neighbor half of hp
                pl.BlockSpec((tm, f_out), lambda i, k: (i, 0)),  # self half of hp (dst prefix)
                pl.BlockSpec((tm, 1), lambda i, k: (i, 0)),      # f32 1/deg (finalize only)
                pl.BlockSpec((1, f_out), lambda i, k: (0, 0)),   # bias (finalize only)
            ],
            out_specs=pl.BlockSpec((tm, f_out), lambda i, k: (i, 0)),
            scratch_shapes=[pltpu.VMEM((tm, f_out), jnp.float32)]),
        compiler_params=pltpu.CompilerParams(
            dimension_semantics=("parallel", "arbitrary"),
            vmem_limit_bytes=_VMEM_LIMIT_BYTES),
    )(adj_i8, hp, hp, inv_deg, bias)


def sage_aggregate_prompt(adj_i8, inv_deg, hp, bias, gfeat_bf16, w1p, w2p, bpp):
    """Last layer + fused prompt head -> (N_dst, C_pad) f32 (classes padded to 128)."""
    n_dst, n_src = adj_i8.shape
    f_out = hp.shape[1] // 2
    n_hid_g = gfeat_bf16.shape[1]
    c_pad = w1p.shape[1]
    tm = _pick_block(n_dst, 512, 32, min_tiles=2)
    tk = _pick_block(n_src, 2048, 128)
    return pl.pallas_call(
        _sage_agg_prompt_kernel,
        out_shape=jax.ShapeDtypeStruct((n_dst, c_pad), jnp.float32),
        grid_spec=pltpu.PrefetchScalarGridSpec(
            num_scalar_prefetch=0,
            grid=(n_dst // tm, n_src // tk),
            in_specs=[
                pl.BlockSpec((tm, tk), lambda i, k: (i, k),
                             pipeline_mode=pl.Buffered(3)),       # A tile (int8, 0/1)
                pl.BlockSpec((tk, f_out), lambda i, k: (k, 1)),   # neighbor half of hp
                pl.BlockSpec((tm, f_out), lambda i, k: (i, 0)),   # self half of hp (dst prefix)
                pl.BlockSpec((tm, 1), lambda i, k: (i, 0)),       # f32 1/deg
                pl.BlockSpec((1, f_out), lambda i, k: (0, 0)),    # SAGE bias
                pl.BlockSpec((tm, n_hid_g), lambda i, k: (i, 0)), # gfeat dst rows (bf16)
                pl.BlockSpec((f_out, c_pad), lambda i, k: (0, 0)),   # prompt W1 (bf16, padded)
                pl.BlockSpec((n_hid_g, c_pad), lambda i, k: (0, 0)), # prompt W2 (bf16, padded)
                pl.BlockSpec((1, c_pad), lambda i, k: (0, 0)),       # prompt bias (padded)
            ],
            out_specs=pl.BlockSpec((tm, c_pad), lambda i, k: (i, 0)),
            scratch_shapes=[pltpu.VMEM((tm, f_out), jnp.float32)]),
        compiler_params=pltpu.CompilerParams(
            dimension_semantics=("parallel", "arbitrary"),
            vmem_limit_bytes=_VMEM_LIMIT_BYTES),
    )(adj_i8, hp, hp, inv_deg, bias, gfeat_bf16, w1p, w2p, bpp)


def graphsage_forward(adjs_i8, inv_degs, feat, gfeat, params):
    """adjs_i8: per-layer binary (N_dst_l, N_src_l) int8 adjacency (self-loops included);
    inv_degs: per-layer (N_dst_l, 1) f32 row scales.  DGL block convention: dst nodes
    are the leading prefix of src nodes."""
    # TODO(synk): dropout is identity in eval mode, so it is not implemented (training-only op).
    h = feat.astype(jnp.bfloat16)
    gfeat_bf16 = gfeat.astype(jnp.bfloat16)
    n_layers = len(adjs_i8)
    for l in range(n_layers - 1):
        w_cat, b = params["layers_cat"][l]
        hp = project(h, w_cat)
        h = sage_aggregate(adjs_i8[l], inv_degs[l], hp, b)   # bf16 out, includes relu
    # last layer: relu + concat(gfeat) + prompt fused into one kernel
    w_cat, b = params["layers_cat"][-1]
    hp = project(h, w_cat)
    w1p, w2p, bpp, n_classes = params["prompt_padded"]
    out_pad = sage_aggregate_prompt(adjs_i8[-1], inv_degs[-1], hp, b,
                                    gfeat_bf16, w1p, w2p, bpp)
    return out_pad[:, :n_classes]


# ---------------------------------------------------------------------------
# Deterministic parameter / input construction
# ---------------------------------------------------------------------------

def make_params(key, in_feats, n_hidden, n_classes, n_layers):
    assert n_hidden % 128 == 0, "kernel tiling assumes a lane-dense hidden dim"
    layer_dims = [(in_feats, n_hidden)] + [(n_hidden, n_hidden)] * (n_layers - 1)
    params = {"layers_cat": []}
    for (f_in, f_out) in layer_dims:
        key, k1, k2, k3 = jax.random.split(key, 4)
        ws = jax.random.normal(k1, (f_in, f_out), jnp.float32) * 0.1
        wn = jax.random.normal(k2, (f_in, f_out), jnp.float32) * 0.1
        b = jax.random.normal(k3, (1, f_out), jnp.float32) * 0.1
        params["layers_cat"].append(
            (jnp.concatenate([ws, wn], axis=1).astype(jnp.bfloat16), b))
    key, k1, k2 = jax.random.split(key, 3)
    # prompt: Linear(2*n_hidden -> n_classes); split into the part multiplying h and the
    # part multiplying gfeat, zero-pad the class axis to a multiple of 128 lanes.
    w_full = jax.random.normal(k1, (2 * n_hidden, n_classes), jnp.float32) * 0.1
    bp = jax.random.normal(k2, (1, n_classes), jnp.float32) * 0.1
    w1, w2 = w_full[:n_hidden], w_full[n_hidden:]
    c_pad = pl.cdiv(n_classes, 128) * 128
    pad = c_pad - n_classes
    params["prompt_padded"] = (
        jnp.pad(w1, ((0, 0), (0, pad))).astype(jnp.bfloat16),
        jnp.pad(w2, ((0, 0), (0, pad))).astype(jnp.bfloat16),
        jnp.pad(bp, ((0, 0), (0, pad))),
        n_classes,
    )
    return params


def make_binary_adj(key, n_dst, n_src):
    """Random block + self loops (dst i == src i). Returns (binary int8 A, f32 1/deg)."""
    a = (jax.random.uniform(key, (n_dst, n_src)) < 0.1).astype(jnp.float32)
    a = jnp.maximum(a, jnp.eye(n_dst, n_src, dtype=jnp.float32))  # no zero in-degree rows
    inv_deg = 1.0 / jnp.sum(a, axis=1, keepdims=True)
    return a.astype(jnp.int8), inv_deg.astype(jnp.float32)


# ---------------------------------------------------------------------------

if __name__ == "__main__":
    IN_FEATS = 64
    N_HIDDEN = 128
    N_CLASSES = 8
    N_LAYERS = 2
    N_SRC = [256, 128]   # src nodes per block
    N_DST = [128, 64]    # dst nodes per block (N_dst < N_src, as in real DGL MFGs)

    root = jax.random.PRNGKey(0)
    k_feat, k_gfeat, k_adj, k_params = jax.random.split(root, 4)

    feat = jax.random.normal(k_feat, (N_SRC[0], IN_FEATS), jnp.float32)    # graph[0].srcdata['feat']
    gfeat = jax.random.normal(k_gfeat, (N_SRC[0], N_HIDDEN), jnp.float32)  # graph[0].srcdata['gfeat']
    adj_keys = jax.random.split(k_adj, N_LAYERS)
    adj_pairs = [make_binary_adj(adj_keys[l], N_DST[l], N_SRC[l]) for l in range(N_LAYERS)]
    adjs_i8 = [p[0] for p in adj_pairs]
    inv_degs = [p[1] for p in adj_pairs]

    params = make_params(k_params, IN_FEATS, N_HIDDEN, N_CLASSES, N_LAYERS)

    out = graphsage_forward(adjs_i8, inv_degs, feat, gfeat, params)
    out = jax.block_until_ready(out)

    # Pure-JAX reference mirroring the kernel arithmetic (bf16 A/projections, f32 accum,
    # f32 inv_deg post-scale, bf16 inter-layer h).
    feat_bf16 = feat.astype(jnp.bfloat16)
    gfeat_bf16 = gfeat.astype(jnp.bfloat16)
    h_ref = feat_bf16
    for l in range(N_LAYERS):
        w_cat, b = params["layers_cat"][l]
        f_out = w_cat.shape[1] // 2
        hp = jnp.dot(h_ref, w_cat, preferred_element_type=jnp.float32).astype(jnp.bfloat16)
        neigh = jnp.dot(adjs_i8[l].astype(jnp.bfloat16), hp[:, f_out:],
                        preferred_element_type=jnp.float32)
        h_f32 = jnp.maximum(neigh * inv_degs[l]
                            + hp[:N_DST[l], :f_out].astype(jnp.float32) + b, 0.0)
        h_ref = h_f32.astype(jnp.bfloat16) if l != N_LAYERS - 1 else h_f32
    w1p, w2p, bpp, _ = params["prompt_padded"]
    ref_pad = (jnp.dot(h_ref.astype(jnp.bfloat16), w1p, preferred_element_type=jnp.float32)
               + jnp.dot(gfeat_bf16[:N_DST[-1]], w2p, preferred_element_type=jnp.float32)
               + bpp)
    ref = ref_pad[:, :N_CLASSES]

    assert out.shape == (N_DST[-1], N_CLASSES)
    assert jnp.allclose(out, ref, atol=2e-2, rtol=2e-2), float(jnp.max(jnp.abs(out - ref)))
    print("KERNEL_OK")
</pallas_src>

<mosaic_0001>
module attributes {stable_mosaic.version = 11 : i64} {
  func.func @_project_kernel(%arg0: i32, %arg1: memref<128x64xbf16, #tpu.memory_space<vmem>>, %arg2: memref<64x256xbf16, #tpu.memory_space<vmem>>, %arg3: memref<128x256xbf16, #tpu.memory_space<vmem>>) attributes {dimension_semantics = [#tpu.dimension_semantics<parallel>], iteration_bounds = array<i64: 2>, scalar_prefetch = 0 : i64, scratch_operands = 0 : i64, tpu.core_type = #tpu.core_type<tc>, window_params = [{transform_indices = @transform_0, window_bounds = array<i64: 128, 64>}, {pipeline_mode = #tpu.pipeline_mode<synchronous>, transform_indices = @transform_1, window_bounds = array<i64: 64, 256>}, {transform_indices = @transform_2, window_bounds = array<i64: 128, 256>}]} {
    %c0 = arith.constant 0 : index
    %c0_0 = arith.constant 0 : index
    %0 = vector.load %arg1[%c0, %c0_0] : memref<128x64xbf16, #tpu.memory_space<vmem>>, vector<128x64xbf16>
    %c0_1 = arith.constant 0 : index
    %c0_2 = arith.constant 0 : index
    %1 = vector.load %arg2[%c0_1, %c0_2] : memref<64x256xbf16, #tpu.memory_space<vmem>>, vector<64x256xbf16>
    %cst = arith.constant dense<0.000000e+00> : vector<128x256xf32>
    %2 = tpu.matmul %0, %1, %cst {dimension_numbers = #tpu.dot_dimension_numbers<[1], [0], [0], [1], [0, 0, 1, 1], [], []>} : vector<128x64xbf16>, vector<64x256xbf16>, vector<128x256xf32> -> vector<128x256xf32>
    %3 = arith.truncf %2 : vector<128x256xf32> to vector<128x256xbf16>
    %c0_3 = arith.constant 0 : index
    %c0_4 = arith.constant 0 : index
    %4 = vector.load %arg3[%c0_3, %c0_4] : memref<128x256xbf16, #tpu.memory_space<vmem>>, vector<128x256xbf16>
    tpu.vector_store %arg3[%c0_3, %c0_4], %3 {strides = array<i32>} : memref<128x256xbf16, #tpu.memory_space<vmem>>, vector<128x256xbf16>,
    return
  }
  func.func @transform_0(%arg0: i32) -> (i32, i32) {
    %c0_i32 = arith.constant 0 : i32
    %c0_i32_0 = arith.constant 0 : i32
    return %arg0, %c0_i32 : i32, i32
  }
  func.func @transform_1(%arg0: i32) -> (i32, i32) {
    %c0_i32 = arith.constant 0 : i32
    %c0_i32_0 = arith.constant 0 : i32
    %c0_i32_1 = arith.constant 0 : i32
    return %c0_i32, %c0_i32_0 : i32, i32
  }
  func.func @transform_2(%arg0: i32) -> (i32, i32) {
    %c0_i32 = arith.constant 0 : i32
    %c0_i32_0 = arith.constant 0 : i32
    return %arg0, %c0_i32 : i32, i32
  }
}

</mosaic_0001>

<llo_original>
// kernel: tpu_custom_call.1
$region0: #{tpu_custom_call.1}
  #allocation0 [shape = 'u32[]', space=smem, size = 0x4, offset = 0x4, fixed_abs, tag = 'smem constant byte address 0x4 - core index']
  #allocation1 [shape = 'u32[144,128]{1,0:T(1,128)}', space=vmem, size = 0x12000, scoped, tag = 'internal scratch']
  %s0 = inlined_call_operand.vmem [shape: bf16[256,64], index: 0, kind: input, shape index: {}]
  %s1 = inlined_call_operand.vmem [shape: bf16[64,256], index: 1, kind: input, shape index: {}]
  %s2 = inlined_call_operand.hbm [shape: bf16[256,256], index: 2, kind: output, shape index: {}]
  %s3 = sld [smem:[#allocation0]]
  $region41: #{tpu_custom_call.1} parent=0
    _
  %s5 = ssub.s32 1, %s3
  %s6 = scalar_select 0, %s5, %s3
  $region1: #{tpu_custom_call.1} parent=0
    #allocation2 [shape = 'u8[131072]{0}', space=vmem, size = 0x20000, scoped, tag = 'output window, operand 0']
    #allocation3 [shape = 's32[2]{0}', space=sflag, size = 0x8, scoped, tag = 'scoped memory for tpu_custom_call.1']
    %7 = vsyncpa [#allocation3], 0
    %s8 = scalar_lea.sflag [#allocation3], 1
    %9 = vsyncpa %s8, 0
    loop: start=0, step=1, limit=4
    $region2: #{tpu_custom_call.1} parent=1 // loop_pre_header
      _
    $region3: #{tpu_custom_call.1} parent=1 // loop_header
      %s11 = sphi 0, %s15
      %p12 = scmp.ge.s32.totalorder %s11, 4
      %s21 = sphi 0, %s23
      %s24 = sphi 0, %s21
      %s25 = sphi 0, %s24
      %s41 = sphi 0, %s25
      %s45 = sphi 0, %s45
      %s47 = sphi 0, %s45
      %s48 = sphi 0, %s47
      %s62 = sphi 0, %s48
      %s68 = sphi 0, %s70
      %s71 = sphi 0, %s68
      %s72 = sphi 0, %s71
      %s88 = sphi 0, %s72
    $region4: #{tpu_custom_call.1} parent=1 // loop_header_branch
      %14 = sbr.rel (%p12) target = $region8
    $region5: #{tpu_custom_call.1} parent=1 // loop_body
      %s16 = ssub.s32 %s11, 1
      %s17 = ssub.s32 %s11, 2
      %s18 = sadd.s32 %s11, 1
      %s19 = ssub.s32 %s11, %s18
      %p20 = scmp.eq.s32.totalorder %s19, 0
      %s22 = sadd.s32 %s21, 1
      %s23 = scalar_select %p20, %s21, %s22
      %p26 = pneg %p20
      %p27 = scmp.eq.s32.totalorder %s11, 1
      %p28 = por %p26, %p27
      %p29 = scmp.ne.s32.totalorder %s21, %s24
      %p30 = scmp.eq.s32.totalorder %s11, 0
      %p31 = por %p29, %p30
      %p32 = scmp.ne.s32.totalorder %s21, %s24
      %p33 = scmp.eq.s32.totalorder %s16, 1
      %p34 = por %p32, %p33
      %p35 = scmp.ne.s32.totalorder %s24, %s25
      %p36 = scmp.eq.s32.totalorder %s16, 0
      %p37 = por %p35, %p36
      %p38 = scmp.ne.s32.totalorder %s24, %s25
      %p39 = scmp.eq.s32.totalorder %s17, 1
      %p40 = por %p38, %p39
      %p42 = scmp.ne.s32.totalorder %s25, %s41
      %p43 = scmp.eq.s32.totalorder %s17, 0
      %p44 = por %p42, %p43
      %s46 = sadd.s32 %s45, 1
      %p49 = scmp.eq.s32.totalorder %s11, 1
      %p50 = scmp.ne.s32.totalorder %s45, %s47
      %p51 = scmp.eq.s32.totalorder %s11, 0
      %p52 = por %p50, %p51
      %p53 = scmp.ne.s32.totalorder %s45, %s47
      %p54 = scmp.eq.s32.totalorder %s16, 1
      %p55 = por %p53, %p54
      %p56 = scmp.ne.s32.totalorder %s47, %s48
      %p57 = scmp.eq.s32.totalorder %s16, 0
      %p58 = por %p56, %p57
      %p59 = scmp.ne.s32.totalorder %s47, %s48
      %p60 = scmp.eq.s32.totalorder %s17, 1
      %p61 = por %p59, %p60
      %p63 = scmp.ne.s32.totalorder %s48, %s62
      %p64 = scmp.eq.s32.totalorder %s17, 0
      %p65 = por %p63, %p64
      %s66 = ssub.s32 %s11, %s18
      %p67 = scmp.eq.s32.totalorder %s66, 0
      %s69 = sadd.s32 %s68, 1
      %s70 = scalar_select %p67, %s68, %s69
      %p73 = pneg %p67
      %p74 = scmp.eq.s32.totalorder %s11, 1
      %p75 = por %p73, %p74
      %p76 = scmp.ne.s32.totalorder %s68, %s71
      %p77 = scmp.eq.s32.totalorder %s11, 0
      %p78 = por %p76, %p77
      %p79 = scmp.ne.s32.totalorder %s68, %s71
      %p80 = scmp.eq.s32.totalorder %s16, 1
      %p81 = por %p79, %p80
      %p82 = scmp.ne.s32.totalorder %s71, %s72
      %p83 = scmp.eq.s32.totalorder %s16, 0
      %p84 = por %p82, %p83
      %p85 = scmp.ne.s32.totalorder %s71, %s72
      %p86 = scmp.eq.s32.totalorder %s17, 1
      %p87 = por %p85, %p86
      %p89 = scmp.ne.s32.totalorder %s72, %s88
      %p90 = scmp.eq.s32.totalorder %s17, 0
      %p91 = por %p89, %p90
      %p92 = scmp.le.s32.totalorder 1, %s11
      %p93 = scmp.lt.s32.totalorder %s11, 3
      %p94 = pnand %p92, %p93
      %p95 = pneg %p94
      // Predicated region
      $region9: #{tpu_custom_call.1} parent=5 // pred_check
        _
      $region10: #{tpu_custom_call.1} parent=5 // pred_check_branch
        %97 = sbr.rel (%p94) target = $region12
      $region11: #{tpu_custom_call.1} parent=5 // pred_region
        %s98 = ssub.s32 %s11, 1
        // Predicated region
        $region13: #{tpu_custom_call.1} parent=11 // pred_check
          %p99 = pneg %p58
        $region14: #{tpu_custom_call.1} parent=11 // pred_check_branch
          %101 = sbr.rel (%p99) target = $region16
        $region15: #{tpu_custom_call.1} parent=11 // pred_region
          _
        $region16: #{tpu_custom_call.1} parent=11 // pred_fallthru
          _
      $region12: #{tpu_custom_call.1} parent=5 // pred_fallthru
        _
      %p102 = scmp.lt.s32.totalorder %s11, 2
      // Predicated region
      $region17: #{tpu_custom_call.1} parent=5 // pred_check
        %p103 = pneg %p102
      $region18: #{tpu_custom_call.1} parent=5 // pred_check_branch
        %105 = sbr.rel (%p103) target = $region20
      $region19: #{tpu_custom_call.1} parent=5 // pred_region
        // Predicated region
        $region21: #{tpu_custom_call.1} parent=19 // pred_check
          %p106 = pneg %p31
        $region22: #{tpu_custom_call.1} parent=19 // pred_check_branch
          %108 = sbr.rel (%p106) target = $region24
        $region23: #{tpu_custom_call.1} parent=19 // pred_region
          %s109 = smul.u32 16, %s11
          %p110 = scmp.lt.s32.totalorder %s109, 31
          %s111 = scalar_select %p110, %s109, 31
          %s112 = smul.addr %s111, 4
          %s113 = scalar_lea.vmem %s0, %s112
          %s114 = smul.u32 16, %s11
        $region24: #{tpu_custom_call.1} parent=19 // pred_fallthru
          _
      $region20: #{tpu_custom_call.1} parent=5 // pred_fallthru
        _
      %p115 = scmp.le.s32.totalorder 1, %s11
      %p116 = scmp.lt.s32.totalorder %s11, 3
      %p117 = pnand %p115, %p116
      %p118 = pneg %p117
      // Predicated region
      $region25: #{tpu_custom_call.1} parent=5 // pred_check
        _
      $region26: #{tpu_custom_call.1} parent=5 // pred_check_branch
        %120 = sbr.rel (%p117) target = $region28
      $region27: #{tpu_custom_call.1} parent=5 // pred_region
        %s121 = ssub.s32 %s11, 1
        %s122 = smul.u32 16, %s16
        %p123 = scmp.lt.s32.totalorder %s122, 31
        %s124 = scalar_select %p123, %s122, 31
        %s125 = smul.addr %s124, 4
        %s126 = scalar_lea.vmem %s0, %s125
        %p127 = pneg %p37
        %p128 = pneg %p34
        %p129 = pneg %p58
        %p130 = pneg %p55
        %p131 = pneg %p84
        %p132 = pneg %p81
        %s133 = sand.u32 %s71, 1
        %s134 = scalar_lea.sflag [#allocation3], %s133
        %s135 = sand.u32 %s71, 1
        %s136 = smul.addr %s135, 128
        %s137 = scalar_lea.vmem [#allocation2], %s136
        %s138 = smul.u32 16, %s16
        %p139 = scmp.lt.s32.totalorder %s138, 31
        %s140 = scalar_select %p139, %s138, 31
        %s141 = smul.addr %s140, 4
        %s142 = scalar_lea.vmem %s0, %s141
        %s143 = smul.u32 16, %s16
        %s144 = smul.u32 16, %s16
        %v146 = vld [vmem:[%s142] sm:$0xf]
        %v147 = vld [vmem:[%s142 + $0x4] sm:$0xf]
        %v148 = vld [vmem:[%s142 + $0x8] sm:$0xf]
        %v149 = vld [vmem:[%s142 + $0xc] sm:$0xf]
        %v150 = vld [vmem:[%s142 + $0x10] sm:$0xf]
        %v151 = vld [vmem:[%s142 + $0x14] sm:$0xf]
        %v152 = vld [vmem:[%s142 + $0x18] sm:$0xf]
        %v153 = vld [vmem:[%s142 + $0x1c] sm:$0xf]
        %v154 = vld [vmem:[%s142 + $0x20] sm:$0xf]
        %v155 = vld [vmem:[%s142 + $0x24] sm:$0xf]
        %v156 = vld [vmem:[%s142 + $0x28] sm:$0xf]
        %v157 = vld [vmem:[%s142 + $0x2c] sm:$0xf]
        %v158 = vld [vmem:[%s142 + $0x30] sm:$0xf]
        %v159 = vld [vmem:[%s142 + $0x34] sm:$0xf]
        %v160 = vld [vmem:[%s142 + $0x38] sm:$0xf]
        %v161 = vld [vmem:[%s142 + $0x3c] sm:$0xf]
        %v162 = vld [vmem:[%s1] sm:$0xff]
        %v163 = vld [vmem:[%s1 + $0x8] sm:$0xff]
        %v164 = vld [vmem:[%s1 + $0x10] sm:$0xff]
        %v165 = vld [vmem:[%s1 + $0x18] sm:$0xff]
        %v166 = vld [vmem:[%s1 + $0x20] sm:$0xff]
        %v167 = vld [vmem:[%s1 + $0x28] sm:$0xff]
        %v168 = vld [vmem:[%s1 + $0x30] sm:$0xff]
        %v169 = vld [vmem:[%s1 + $0x38] sm:$0xff]
        %v186 = vunpack.c.l.b16 %v146
        %v187 = vunpack.c.l.b16 %v147
        %v188 = vunpack.c.l.b16 %v148
        %v189 = vunpack.c.l.b16 %v149
        %v190 = vunpack.c.l.b16 %v150
        %v191 = vunpack.c.l.b16 %v151
        %v192 = vunpack.c.l.b16 %v152
        %v193 = vunpack.c.l.b16 %v153
        %v194 = vunpack.c.l.b16 %v154
        %v195 = vunpack.c.l.b16 %v155
        %v196 = vunpack.c.l.b16 %v156
        %v197 = vunpack.c.l.b16 %v157
        %v198 = vunpack.c.l.b16 %v158
        %v199 = vunpack.c.l.b16 %v159
        %v200 = vunpack.c.l.b16 %v160
        %v201 = vunpack.c.l.b16 %v161
        %v202 = vpack.c.b16 %v187, %v186
        %v203 = vpack.c.b16 %v189, %v188
        %v204 = vpack.c.b16 %v191, %v190
        %v205 = vpack.c.b16 %v193, %v192
        %v206 = vpack.c.b16 %v195, %v194
        %v207 = vpack.c.b16 %v197, %v196
        %v208 = vpack.c.b16 %v199, %v198
        %v209 = vpack.c.b16 %v201, %v200
        %v218 = vunpack.c.l.b16 %v162
        %v219 = vunpack.c.h.b16 %v162
        %v220 = vunpack.c.l.b16 %v163
        %v221 = vunpack.c.h.b16 %v163
        %v222 = vunpack.c.l.b16 %v164
        %v223 = vunpack.c.h.b16 %v164
        %v224 = vunpack.c.l.b16 %v165
        %v225 = vunpack.c.h.b16 %v165
        %v226 = vunpack.c.l.b16 %v166
        %v227 = vunpack.c.h.b16 %v166
        %v228 = vunpack.c.l.b16 %v167
        %v229 = vunpack.c.h.b16 %v167
        %v230 = vunpack.c.l.b16 %v168
        %v231 = vunpack.c.h.b16 %v168
        %v232 = vunpack.c.l.b16 %v169
        %v233 = vunpack.c.h.b16 %v169
        %v234 = vpack.c.b16 %v220, %v218
        %v235 = vpack.c.b16 %v221, %v219
        %v236 = vpack.c.b16 %v224, %v222
        %v237 = vpack.c.b16 %v225, %v223
        %v238 = vpack.c.b16 %v228, %v226
        %v239 = vpack.c.b16 %v229, %v227
        %v240 = vpack.c.b16 %v232, %v230
        %v241 = vpack.c.b16 %v233, %v231
        %vm250 = vcmask 523264
        %v252 = vsel %vm250, %v202, 0
        %v255 = vsel %vm250, %v203, 0
        %v258 = vsel %vm250, %v204, 0
        %v261 = vsel %vm250, %v205, 0
        %v264 = vsel %vm250, %v206, 0
        %v267 = vsel %vm250, %v207, 0
        %v270 = vsel %vm250, %v208, 0
        %v273 = vsel %vm250, %v209, 0
        %275 = vmatprep.subr.bf16.mxu0 %v235
        %276 = vmatpush1.bf16.msra.mxu0 %v234
        %277 = vmatprep.subr.bf16.mxu0 %v237
        %278 = vmatpush1.bf16.msra.mxu0 %v236
        %279 = vmatprep.subr.bf16.mxu0 %v239
        %280 = vmatpush1.bf16.msra.mxu0 %v238
        %281 = vmatprep.subr.bf16.mxu0 %v241
        %282 = vmatpush1.bf16.msra.mxu0 %v240
        %283 = vmatprep.subr.bf16.mxu0 0
        %284 = vmatpush1.bf16.msra.mxu0 0
        %285 = vmatprep.subr.bf16.mxu0 0
        %286 = vmatpush1.bf16.msra.mxu0 0
        %287 = vmatprep.subr.bf16.mxu0 0
        %288 = vmatpush1.bf16.msra.mxu0 0
        %289 = vmatprep.subr.bf16.mxu0 0
        %290 = vmatpush1.bf16.msra.mxu0 0
        %291 = vmatprep.subr.bf16.mxu0 0
        %292 = vmatpush1.bf16.msra.mxu0 0
        %293 = vmatprep.subr.bf16.mxu0 0
        %294 = vmatpush1.bf16.msra.mxu0 0
        %295 = vmatprep.subr.bf16.mxu0 0
        %296 = vmatpush1.bf16.msra.mxu0 0
        %297 = vmatprep.subr.bf16.mxu0 0
        %298 = vmatpush1.bf16.msra.mxu0 0
        %299 = vmatprep.subr.bf16.mxu0 0
        %300 = vmatpush1.bf16.msra.mxu0 0
        %301 = vmatprep.subr.bf16.mxu0 0
        %302 = vmatpush1.bf16.msra.mxu0 0
        %303 = vmatprep.subr.bf16.mxu0 0
        %304 = vmatpush1.bf16.msra.mxu0 0
        %305 = vmatprep.subr.bf16.mxu0 0
        %306 = vmatpush1.bf16.msra.mxu0 0
        %307 = vmatprep.mubr.bf16.mxu0 0
        %308 = vmatmul.mubr.bf16.gmra.mrb[0].mxu0 %v252
        %v309 = vpop.f32.mrb[0].mxu0
        %v310 = vadd.f32 0.0, %v309
        %v311 = vpop.f32.mrb[0].mxu0
        %v312 = vadd.f32 0.0, %v311
        %v313 = vpop.f32.mrb[0].mxu0
        %v314 = vadd.f32 0.0, %v313
        %v315 = vpop.f32.mrb[0].mxu0
        %v316 = vadd.f32 0.0, %v315
        %317 = vmatprep.mubr.bf16.mxu0 0
        %318 = vmatmul.mubr.bf16.gmra.mrb[0].mxu0 %v255
        %v319 = vpop.f32.mrb[0].mxu0
        %v320 = vadd.f32 0.0, %v319
        %v321 = vpop.f32.mrb[0].mxu0
        %v322 = vadd.f32 0.0, %v321
        %v323 = vpop.f32.mrb[0].mxu0
        %v324 = vadd.f32 0.0, %v323
        %v325 = vpop.f32.mrb[0].mxu0
        %v326 = vadd.f32 0.0, %v325
        %327 = vmatprep.mubr.bf16.mxu0 0
        %328 = vmatmul.mubr.bf16.gmra.mrb[0].mxu0 %v258
        %v329 = vpop.f32.mrb[0].mxu0
        %v330 = vadd.f32 0.0, %v329
        %v331 = vpop.f32.mrb[0].mxu0
        %v332 = vadd.f32 0.0, %v331
        %v333 = vpop.f32.mrb[0].mxu0
        %v334 = vadd.f32 0.0, %v333
        %v335 = vpop.f32.mrb[0].mxu0
        %v336 = vadd.f32 0.0, %v335
        %337 = vmatprep.mubr.bf16.mxu0 0
        %338 = vmatmul.mubr.bf16.gmra.mrb[0].mxu0 %v261
        %v339 = vpop.f32.mrb[0].mxu0
        %v340 = vadd.f32 0.0, %v339
        %v341 = vpop.f32.mrb[0].mxu0
        %v342 = vadd.f32 0.0, %v341
        %v343 = vpop.f32.mrb[0].mxu0
        %v344 = vadd.f32 0.0, %v343
        %v345 = vpop.f32.mrb[0].mxu0
        %v346 = vadd.f32 0.0, %v345
        %347 = vmatprep.mubr.bf16.mxu0 0
        %348 = vmatmul.mubr.bf16.gmra.mrb[0].mxu0 %v264
        %v349 = vpop.f32.mrb[0].mxu0
        %v350 = vadd.f32 0.0, %v349
        %v351 = vpop.f32.mrb[0].mxu0
        %v352 = vadd.f32 0.0, %v351
        %v353 = vpop.f32.mrb[0].mxu0
        %v354 = vadd.f32 0.0, %v353
        %v355 = vpop.f32.mrb[0].mxu0
        %v356 = vadd.f32 0.0, %v355
        %357 = vmatprep.mubr.bf16.mxu0 0
        %358 = vmatmul.mubr.bf16.gmra.mrb[0].mxu0 %v267
        %v359 = vpop.f32.mrb[0].mxu0
        %v360 = vadd.f32 0.0, %v359
        %v361 = vpop.f32.mrb[0].mxu0
        %v362 = vadd.f32 0.0, %v361
        %v363 = vpop.f32.mrb[0].mxu0
        %v364 = vadd.f32 0.0, %v363
        %v365 = vpop.f32.mrb[0].mxu0
        %v366 = vadd.f32 0.0, %v365
        %367 = vmatprep.mubr.bf16.mxu0 0
        %368 = vmatmul.mubr.bf16.gmra.mrb[0].mxu0 %v270
        %v369 = vpop.f32.mrb[0].mxu0
        %v370 = vadd.f32 0.0, %v369
        %v371 = vpop.f32.mrb[0].mxu0
        %v372 = vadd.f32 0.0, %v371
        %v373 = vpop.f32.mrb[0].mxu0
        %v374 = vadd.f32 0.0, %v373
        %v375 = vpop.f32.mrb[0].mxu0
        %v376 = vadd.f32 0.0, %v375
        %377 = vmatprep.mubr.bf16.mxu0 0
        %378 = vmatmul.mubr.bf16.gmra.mrb[0].mxu0 %v273
        %v379 = vpop.f32.mrb[0].mxu0
        %v380 = vadd.f32 0.0, %v379
        %v381 = vpop.f32.mrb[0].mxu0
        %v382 = vadd.f32 0.0, %v381
        %v383 = vpop.f32.mrb[0].mxu0
        %v384 = vadd.f32 0.0, %v383
        %v385 = vpop.f32.mrb[0].mxu0
        %v386 = vadd.f32 0.0, %v385
        %387 = vdwg.mxu0
        %v388 = vpack.c.bf16 %v314, %v310
        %v389 = vpack.c.bf16 %v316, %v312
        %v390 = vpack.c.bf16 %v324, %v320
        %v391 = vpack.c.bf16 %v326, %v322
        %v392 = vpack.c.bf16 %v334, %v330
        %v393 = vpack.c.bf16 %v336, %v332
        %v394 = vpack.c.bf16 %v344, %v340
        %v395 = vpack.c.bf16 %v346, %v342
        %v396 = vpack.c.bf16 %v354, %v350
        %v397 = vpack.c.bf16 %v356, %v352
        %v398 = vpack.c.bf16 %v364, %v360
        %v399 = vpack.c.bf16 %v366, %v362
        %v400 = vpack.c.bf16 %v374, %v370
        %v401 = vpack.c.bf16 %v376, %v372
        %v402 = vpack.c.bf16 %v384, %v380
        %v403 = vpack.c.bf16 %v386, %v382
        %v420 = vunpack.c.l.b16 %v388
        %v421 = vunpack.c.l.b16 %v389
        %v422 = vunpack.c.h.b16 %v388
        %v423 = vunpack.c.h.b16 %v389
        %v424 = vunpack.c.l.b16 %v390
        %v425 = vunpack.c.l.b16 %v391
        %v426 = vunpack.c.h.b16 %v390
        %v427 = vunpack.c.h.b16 %v391
        %v428 = vunpack.c.l.b16 %v392
        %v429 = vunpack.c.l.b16 %v393
        %v430 = vunpack.c.h.b16 %v392
        %v431 = vunpack.c.h.b16 %v393
        %v432 = vunpack.c.l.b16 %v394
        %v433 = vunpack.c.l.b16 %v395
        %v434 = vunpack.c.h.b16 %v394
        %v435 = vunpack.c.h.b16 %v395
        %v436 = vunpack.c.l.b16 %v396
        %v437 = vunpack.c.l.b16 %v397
        %v438 = vunpack.c.h.b16 %v396
        %v439 = vunpack.c.h.b16 %v397
        %v440 = vunpack.c.l.b16 %v398
        %v441 = vunpack.c.l.b16 %v399
        %v442 = vunpack.c.h.b16 %v398
        %v443 = vunpack.c.h.b16 %v399
        %v444 = vunpack.c.l.b16 %v400
        %v445 = vunpack.c.l.b16 %v401
        %v446 = vunpack.c.h.b16 %v400
        %v447 = vunpack.c.h.b16 %v401
        %v448 = vunpack.c.l.b16 %v402
        %v449 = vunpack.c.l.b16 %v403
        %v450 = vunpack.c.h.b16 %v402
        %v451 = vunpack.c.h.b16 %v403
        %v452 = vpack.c.b16 %v421, %v420
        %v453 = vpack.c.b16 %v423, %v422
        %v454 = vpack.c.b16 %v425, %v424
        %v455 = vpack.c.b16 %v427, %v426
        %v456 = vpack.c.b16 %v429, %v428
        %v457 = vpack.c.b16 %v431, %v430
        %v458 = vpack.c.b16 %v433, %v432
        %v459 = vpack.c.b16 %v435, %v434
        %v460 = vpack.c.b16 %v437, %v436
        %v461 = vpack.c.b16 %v439, %v438
        %v462 = vpack.c.b16 %v441, %v440
        %v463 = vpack.c.b16 %v443, %v442
        %v464 = vpack.c.b16 %v445, %v444
        %v465 = vpack.c.b16 %v447, %v446
        %v466 = vpack.c.b16 %v449, %v448
        %v467 = vpack.c.b16 %v451, %v450
        %484 = vst [vmem:[%s137] sm:$0xff] %v452
        %485 = vst [vmem:[%s137 + $0x8] sm:$0xff] %v453
        %486 = vst [vmem:[%s137 + $0x10] sm:$0xff] %v454
        %487 = vst [vmem:[%s137 + $0x18] sm:$0xff] %v455
        %488 = vst [vmem:[%s137 + $0x20] sm:$0xff] %v456
        %489 = vst [vmem:[%s137 + $0x28] sm:$0xff] %v457
        %490 = vst [vmem:[%s137 + $0x30] sm:$0xff] %v458
        %491 = vst [vmem:[%s137 + $0x38] sm:$0xff] %v459
        %492 = vst [vmem:[%s137 + $0x40] sm:$0xff] %v460
        %493 = vst [vmem:[%s137 + $0x48] sm:$0xff] %v461
        %494 = vst [vmem:[%s137 + $0x50] sm:$0xff] %v462
        %495 = vst [vmem:[%s137 + $0x58] sm:$0xff] %v463
        %496 = vst [vmem:[%s137 + $0x60] sm:$0xff] %v464
        %497 = vst [vmem:[%s137 + $0x68] sm:$0xff] %v465
        %498 = vst [vmem:[%s137 + $0x70] sm:$0xff] %v466
        %499 = vst [vmem:[%s137 + $0x78] sm:$0xff] %v467
        %s500 = sand.u32 %s71, 1
        %s501 = scalar_lea.sflag [#allocation3], %s500
        %s502 = sand.u32 %s71, 1
        %s503 = smul.addr %s502, 128
        %s504 = scalar_lea.vmem [#allocation2], %s503
        // Predicated region
        $region29: #{tpu_custom_call.1} parent=27 // pred_check
          %p505 = pneg %p81
        $region30: #{tpu_custom_call.1} parent=27 // pred_check_branch
          %507 = sbr.rel (%p505) target = $region32
        $region31: #{tpu_custom_call.1} parent=27 // pred_region
          %s508 = smul.u32 16, %s16
          %s510 = ssub.s32 2048, 2048
          %511 = vsyncadd %s501, %s510
          %s512 = smul.addr %s508, 2
          %s513 = smul.addr %s512, 64
          %s514 = scalar_lea.hbm %s2, %s513
          %s515 = sshll.u32 %s504, 4
          %s516 = int_to_ptr.vmem [resolvable:$true] %s515
          %521 = dma.vmem_to_hbm [thread:$0]  %s516, 2048, %s514, %s501, 128, 128, 8
        $region32: #{tpu_custom_call.1} parent=27 // pred_fallthru
          _
      $region28: #{tpu_custom_call.1} parent=5 // pred_fallthru
        _
      %p522 = scmp.le.s32.totalorder 2, %s11
      // Predicated region
      $region33: #{tpu_custom_call.1} parent=5 // pred_check
        %p523 = pneg %p522
      $region34: #{tpu_custom_call.1} parent=5 // pred_check_branch
        %525 = sbr.rel (%p523) target = $region36
      $region35: #{tpu_custom_call.1} parent=5 // pred_region
        %s526 = ssub.s32 %s11, 2
        // Predicated region
        $region37: #{tpu_custom_call.1} parent=35 // pred_check
          %p527 = pneg %p87
        $region38: #{tpu_custom_call.1} parent=35 // pred_check_branch
          %529 = sbr.rel (%p527) target = $region40
        $region39: #{tpu_custom_call.1} parent=35 // pred_region
          %s530 = sand.u32 %s72, 1
          %s531 = scalar_lea.sflag [#allocation3], %s530
          %s532 = sand.u32 %s72, 1
          %s533 = smul.addr %s532, 128
          %s534 = scalar_lea.vmem [#allocation2], %s533
          %535 = dma.done %s531, 2048
        $region40: #{tpu_custom_call.1} parent=35 // pred_fallthru
          _
      $region36: #{tpu_custom_call.1} parent=5 // pred_fallthru
        _
    $region6: #{tpu_custom_call.1} parent=1 // loop_footer
      %s15 = sadd.s32 1, %s11
    $region7: #{tpu_custom_call.1} parent=1 // loop_footer_branch
      %10 = sbr.rel target = $region3
    $region8: #{tpu_custom_call.1} parent=1 // loop_exit
      _
    %536 = vsyncpa [#allocation3], 1
    %s537 = scalar_lea.sflag [#allocation3], 1
    %538 = vsyncpa %s537, 1

</llo_original>
